<compile_context>
chip_gen: v6e
topology: v6e:2x2x1
jax: 0.10.0
libtpu: 0.0.40
codegen_flags: <defaults>
</compile_context>

<pallas_src>
import jax
import jax.numpy as jnp
from jax.experimental import pallas as pl
from jax.experimental.pallas import tpu as pltpu

BN_EPS = 1e-5
HIGHEST = jax.lax.Precision.HIGHEST


# ----------------------------------------------------------------------------- kernel
def mlp_kernel(x_ref, w1_ref, b1_ref, w2_ref, b2_ref, w3_ref, b3_ref, o_ref):
    # Linear(input_dim, l1) + ReLU          (BN1 folded into w2/b2, Dropout = identity)
    h1 = jnp.dot(x_ref[...], w1_ref[...], preferred_element_type=jnp.float32)
    h1 = jnp.maximum(h1 + b1_ref[...], 0.0)                      # f32

    # Linear(l1, l2) [BN1 folded in] + ReLU (BN2 folded into w3/b3, Dropout = identity)
    h2 = jnp.dot(h1.astype(w2_ref.dtype), w2_ref[...],
                 preferred_element_type=jnp.float32)
    h2 = jnp.maximum(h2 + b2_ref[...], 0.0)                      # f32

    # Linear(l2, 1) [BN2 folded in] + Sigmoid.
    # Computed as w3_row (1,l2) contracted against h2 (tile_b,l2) so the result is a
    # lane-dense (1, tile_b) row: avoids masked (tile_b,1) stores and any relayout.
    logits = jax.lax.dot_general(
        w3_ref[...], h2.astype(w3_ref.dtype),
        dimension_numbers=(((1,), (1,)), ((), ())),
        preferred_element_type=jnp.float32,
    ) + b3_ref[0, 0]                                             # scalar bias from SMEM

    # sigmoid = 1 / (1 + exp(-x)) : exp on the EUP, approx reciprocal on the EUP too.
    o_ref[...] = pl.reciprocal(1.0 + jnp.exp(-logits), approx=True)


# ----------------------------------------------------------------------------- wrapper
def binary_classifier_forward(x, folded, *, tile_b=1024):
    """x: [B, input_dim] f32/bf16; folded: params from fold_bn_into_linears().

    tile_b: batch rows per grid step.  Must be a multiple of 128 (it is clamped to the
    full batch when B <= tile_b, in which case any B is fine).  On v5e keep
    double-buffered x tiles + f32 intermediates inside the 16 MiB scoped-VMEM default;
    at these layer widths tile_b=1024 uses only a few MB.
    """
    B, din = x.shape
    l1 = folded["w1"].shape[1]
    l2 = folded["w2"].shape[1]
    wdt = folded["w1"].dtype

    # bf16 cast only -- NO zero-pad copy of x (pad was doubling x's HBM traffic).
    x_c = x.astype(wdt)

    if B <= tile_b:
        # Single tile covering the whole batch: block_shape == full array dims, which
        # satisfies the (8,128) rule for any B, and there is no padding at all.
        tile = B
        num_tiles = 1
    else:
        assert tile_b % 128 == 0, "tile_b must be a multiple of 128 when B > tile_b"
        tile = tile_b
        num_tiles = pl.cdiv(B, tile)
    b_out = num_tiles * tile   # output padded so every output block is full/unmasked

    nbytes = lambda a: a.size * a.dtype.itemsize
    bytes_accessed = (nbytes(x_c) + b_out * 4
                      + sum(nbytes(folded[k])
                            for k in ("w1", "b1", "w2", "b2", "w3_row", "b3")))
    flops = 2 * B * (din * l1 + l1 * l2 + l2)

    out_row = pl.pallas_call(
        mlp_kernel,
        out_shape=jax.ShapeDtypeStruct((1, b_out), jnp.float32),
        grid=(num_tiles,),
        in_specs=[
            pl.BlockSpec((tile, din), lambda i: (i, 0)),   # x batch tile (pipelined;
                                                           #  last block may be partial)
            pl.BlockSpec((din, l1), lambda i: (0, 0)),     # w1   (resident, bf16)
            pl.BlockSpec((1, l1), lambda i: (0, 0)),       # b1   (f32)
            pl.BlockSpec((l1, l2), lambda i: (0, 0)),      # w2'  (BN1 folded, bf16)
            pl.BlockSpec((1, l2), lambda i: (0, 0)),       # b2'  (f32)
            pl.BlockSpec((1, l2), lambda i: (0, 0)),       # w3'  row (BN2 folded)
            pl.BlockSpec(memory_space=pltpu.MemorySpace.SMEM),  # b3' scalar via SMEM
        ],
        out_specs=pl.BlockSpec((1, tile), lambda i: (0, i)),  # lane-dense output row
        compiler_params=pltpu.CompilerParams(
            # batch axis is embarrassingly parallel: split across both TCs on v7x
            # (only engages when num_tiles >= 2).
            dimension_semantics=("parallel",),
        ),
        cost_estimate=pl.CostEstimate(
            flops=flops, transcendentals=2 * B, bytes_accessed=bytes_accessed),
    )(x_c, folded["w1"], folded["b1"], folded["w2"], folded["b2"],
      folded["w3_row"], folded["b3"])

    # Columns >= B (present only when B > tile_b) came from the undefined tail of the
    # partial x block and are discarded here -- never read them.
    return out_row[0, :B].reshape(B, 1)


# ------------------------------------------------------------------- params / folding
def init_params(key, input_dim, l1, l2):
    """PyTorch-style raw params (weights stored [in, out]; BN stats non-trivial)."""
    ks = jax.random.split(key, 10)

    def lin(kw, kb, fan_in, fan_out):
        bound = fan_in ** -0.5
        w = jax.random.uniform(kw, (fan_in, fan_out), jnp.float32, -bound, bound)
        b = jax.random.uniform(kb, (1, fan_out), jnp.float32, -bound, bound)
        return w, b

    w1, b1 = lin(ks[0], ks[1], input_dim, l1)
    w2, b2 = lin(ks[2], ks[3], l1, l2)
    w3, b3 = lin(ks[4], ks[5], l2, 1)

    m1 = 0.1 * jax.random.normal(ks[6], (1, l1), jnp.float32)
    v1 = jnp.abs(1.0 + 0.1 * jax.random.normal(ks[7], (1, l1), jnp.float32))
    m2 = 0.1 * jax.random.normal(ks[8], (1, l2), jnp.float32)
    v2 = jnp.abs(1.0 + 0.1 * jax.random.normal(ks[9], (1, l2), jnp.float32))

    return dict(
        w1=w1, b1=b1, g1=jnp.ones((1, l1), jnp.float32), be1=jnp.zeros((1, l1), jnp.float32),
        m1=m1, v1=v1,
        w2=w2, b2=b2, g2=jnp.ones((1, l2), jnp.float32), be2=jnp.zeros((1, l2), jnp.float32),
        m2=m2, v2=v2,
        w3=w3, b3=b3,
    )


def fold_bn_into_linears(p, weight_dtype=jnp.bfloat16):
    """Fold eval-mode BatchNorm affines into the following Linear layers.

    BN(h) W + b = h (diag(a) W) + (c W + b)  with a = g/sqrt(v+eps), c = be - m*a.
    """
    a1 = p["g1"] * jax.lax.rsqrt(p["v1"] + BN_EPS)      # (1, l1)
    c1 = p["be1"] - p["m1"] * a1                        # (1, l1)
    a2 = p["g2"] * jax.lax.rsqrt(p["v2"] + BN_EPS)      # (1, l2)
    c2 = p["be2"] - p["m2"] * a2                        # (1, l2)

    w2f = a1.T * p["w2"]                                # diag(a1) @ W2  -> (l1, l2)
    b2f = c1 @ p["w2"] + p["b2"]                        # (1, l2)
    w3f = a2.T * p["w3"]                                # diag(a2) @ W3  -> (l2, 1)
    b3f = c2 @ p["w3"] + p["b3"]                        # (1, 1)

    return dict(
        w1=p["w1"].astype(weight_dtype),
        b1=p["b1"].astype(jnp.float32),
        w2=w2f.astype(weight_dtype),
        b2=b2f.astype(jnp.float32),
        w3_row=w3f.T.astype(weight_dtype),              # (1, l2)
        b3=b3f.astype(jnp.float32),                     # (1, 1) -> SMEM scalar
    )


# ------------------------------------------------------------------------- references
def reference_forward(x, p):
    """f32 layer-by-layer forward, identical to the PyTorch module in eval() mode."""
    h1 = jnp.maximum(jnp.dot(x, p["w1"], precision=HIGHEST) + p["b1"], 0.0)
    h1 = (h1 - p["m1"]) * jax.lax.rsqrt(p["v1"] + BN_EPS) * p["g1"] + p["be1"]
    h2 = jnp.maximum(jnp.dot(h1, p["w2"], precision=HIGHEST) + p["b2"], 0.0)
    h2 = (h2 - p["m2"]) * jax.lax.rsqrt(p["v2"] + BN_EPS) * p["g2"] + p["be2"]
    return jax.nn.sigmoid(jnp.dot(h2, p["w3"], precision=HIGHEST) + p["b3"])


def folded_reference(x, f):
    """Plain-XLA mirror of the kernel math on the folded params (same casts)."""
    h1 = jnp.dot(x.astype(f["w1"].dtype), f["w1"],
                 preferred_element_type=jnp.float32, precision=HIGHEST) + f["b1"]
    h1 = jnp.maximum(h1, 0.0)
    h2 = jnp.dot(h1.astype(f["w2"].dtype), f["w2"],
                 preferred_element_type=jnp.float32, precision=HIGHEST) + f["b2"]
    h2 = jnp.maximum(h2, 0.0)
    logits = jnp.dot(h2.astype(f["w3_row"].dtype), f["w3_row"].T,
                     preferred_element_type=jnp.float32, precision=HIGHEST) + f["b3"]
    return jax.nn.sigmoid(logits)


# ------------------------------------------------------------------------------ main
if __name__ == "__main__":
    B, INPUT_DIM, L1, L2 = 200, 64, 128, 64

    key = jax.random.PRNGKey(0)
    kx, kp = jax.random.split(key)
    x = jax.random.normal(kx, (B, INPUT_DIM), jnp.float32)
    params = init_params(kp, INPUT_DIM, L1, L2)

    # 1) BN-fold algebra check (f32): folded formulation == original eval forward.
    folded_f32 = fold_bn_into_linears(params, weight_dtype=jnp.float32)
    ref = reference_forward(x, params)
    ref_folded = folded_reference(x, folded_f32)
    assert jnp.allclose(ref, ref_folded, atol=1e-5, rtol=1e-5), \
        float(jnp.max(jnp.abs(ref - ref_folded)))

    # 2) Kernel check: Pallas kernel == XLA version of the same bf16-weight math.
    #    (tolerance 1e-3 absorbs the ~2^-12 approx-reciprocal error in the sigmoid)
    folded_bf16 = fold_bn_into_linears(params, weight_dtype=jnp.bfloat16)
    ref_bf16 = folded_reference(x, folded_bf16)

    #    a) single-tile path (B <= tile_b, no padding at all)
    out = jax.block_until_ready(binary_classifier_forward(x, folded_bf16))
    assert out.shape == (B, 1), out.shape
    assert jnp.allclose(out, ref_bf16, atol=1e-3, rtol=1e-3), \
        float(jnp.max(jnp.abs(out - ref_bf16)))

    #    b) multi-tile path (grid of 2, ragged partial last x block, padded output)
    out_tiled = jax.block_until_ready(
        binary_classifier_forward(x, folded_bf16, tile_b=128))
    assert out_tiled.shape == (B, 1), out_tiled.shape
    assert jnp.allclose(out_tiled, ref_bf16, atol=1e-3, rtol=1e-3), \
        float(jnp.max(jnp.abs(out_tiled - ref_bf16)))
    assert jnp.allclose(out, out_tiled, atol=1e-6), \
        float(jnp.max(jnp.abs(out - out_tiled)))

    # 3) End-to-end sanity vs. the f32 PyTorch-style forward (bf16 rounding only).
    assert jnp.allclose(out, ref, atol=5e-2), float(jnp.max(jnp.abs(out - ref)))

    print("KERNEL_OK")
</pallas_src>

<mosaic_0001>
module attributes {stable_mosaic.version = 11 : i64} {
  func.func @mlp_kernel(%arg0: i32, %arg1: memref<200x64xbf16, #tpu.memory_space<vmem>>, %arg2: memref<64x128xbf16, #tpu.memory_space<vmem>>, %arg3: memref<1x128xf32, #tpu.memory_space<vmem>>, %arg4: memref<128x64xbf16, #tpu.memory_space<vmem>>, %arg5: memref<1x64xf32, #tpu.memory_space<vmem>>, %arg6: memref<1x64xbf16, #tpu.memory_space<vmem>>, %arg7: memref<1x1xf32, #tpu.memory_space<smem>>, %arg8: memref<1x200xf32, #tpu.memory_space<vmem>>) attributes {dimension_semantics = [#tpu.dimension_semantics<parallel>], iteration_bounds = array<i64: 1>, scalar_prefetch = 0 : i64, scratch_operands = 0 : i64, tpu.core_type = #tpu.core_type<tc>, window_params = [{transform_indices = @transform_0, window_bounds = array<i64: 200, 64>}, {pipeline_mode = #tpu.pipeline_mode<synchronous>, transform_indices = @transform_1, window_bounds = array<i64: 64, 128>}, {pipeline_mode = #tpu.pipeline_mode<synchronous>, transform_indices = @transform_2, window_bounds = array<i64: 1, 128>}, {pipeline_mode = #tpu.pipeline_mode<synchronous>, transform_indices = @transform_3, window_bounds = array<i64: 128, 64>}, {pipeline_mode = #tpu.pipeline_mode<synchronous>, transform_indices = @transform_4, window_bounds = array<i64: 1, 64>}, {pipeline_mode = #tpu.pipeline_mode<synchronous>, transform_indices = @transform_5, window_bounds = array<i64: 1, 64>}, {transform_indices = @transform_6, window_bounds = array<i64: 1, 1>}, {transform_indices = @transform_7, window_bounds = array<i64: 1, 200>}]} {
    %c0 = arith.constant 0 : index
    %c0_0 = arith.constant 0 : index
    %0 = vector.load %arg1[%c0, %c0_0] : memref<200x64xbf16, #tpu.memory_space<vmem>>, vector<200x64xbf16>
    %c0_1 = arith.constant 0 : index
    %c0_2 = arith.constant 0 : index
    %1 = vector.load %arg2[%c0_1, %c0_2] : memref<64x128xbf16, #tpu.memory_space<vmem>>, vector<64x128xbf16>
    %cst = arith.constant dense<0.000000e+00> : vector<200x128xf32>
    %2 = tpu.matmul %0, %1, %cst {dimension_numbers = #tpu.dot_dimension_numbers<[1], [0], [0], [1], [0, 0, 1, 1], [], []>} : vector<200x64xbf16>, vector<64x128xbf16>, vector<200x128xf32> -> vector<200x128xf32>
    %c0_3 = arith.constant 0 : index
    %c0_4 = arith.constant 0 : index
    %3 = vector.load %arg3[%c0_3, %c0_4] : memref<1x128xf32, #tpu.memory_space<vmem>>, vector<1x128xf32>
    %4 = vector.broadcast %3 : vector<1x128xf32> to vector<200x128xf32>
    %5 = arith.addf %2, %4 : vector<200x128xf32>
    %cst_5 = arith.constant 0.000000e+00 : f32
    %6 = vector.broadcast %cst_5 : f32 to vector<200x128xf32>
    %7 = arith.maximumf %5, %6 : vector<200x128xf32>
    %8 = arith.truncf %7 : vector<200x128xf32> to vector<200x128xbf16>
    %c0_6 = arith.constant 0 : index
    %c0_7 = arith.constant 0 : index
    %9 = vector.load %arg4[%c0_6, %c0_7] : memref<128x64xbf16, #tpu.memory_space<vmem>>, vector<128x64xbf16>
    %cst_8 = arith.constant dense<0.000000e+00> : vector<200x64xf32>
    %10 = tpu.matmul %8, %9, %cst_8 {dimension_numbers = #tpu.dot_dimension_numbers<[1], [0], [0], [1], [0, 0, 1, 1], [], []>} : vector<200x128xbf16>, vector<128x64xbf16>, vector<200x64xf32> -> vector<200x64xf32>
    %c0_9 = arith.constant 0 : index
    %c0_10 = arith.constant 0 : index
    %11 = vector.load %arg5[%c0_9, %c0_10] : memref<1x64xf32, #tpu.memory_space<vmem>>, vector<1x64xf32>
    %12 = vector.broadcast %11 : vector<1x64xf32> to vector<200x64xf32>
    %13 = arith.addf %10, %12 : vector<200x64xf32>
    %cst_11 = arith.constant 0.000000e+00 : f32
    %14 = vector.broadcast %cst_11 : f32 to vector<200x64xf32>
    %15 = arith.maximumf %13, %14 : vector<200x64xf32>
    %c0_12 = arith.constant 0 : index
    %c0_13 = arith.constant 0 : index
    %16 = vector.load %arg6[%c0_12, %c0_13] : memref<1x64xbf16, #tpu.memory_space<vmem>>, vector<1x64xbf16>
    %17 = arith.truncf %15 : vector<200x64xf32> to vector<200x64xbf16>
    %cst_14 = arith.constant dense<0.000000e+00> : vector<1x200xf32>
    %18 = tpu.matmul %16, %17, %cst_14 {dimension_numbers = #tpu.dot_dimension_numbers<[1], [1], [0], [0], [0, 0, 1, 0], [], []>} : vector<1x64xbf16>, vector<200x64xbf16>, vector<1x200xf32> -> vector<1x200xf32>
    %c0_15 = arith.constant 0 : index
    %c0_16 = arith.constant 0 : index
    %19 = memref.load %arg7[%c0_15, %c0_16] : memref<1x1xf32, #tpu.memory_space<smem>>
    %20 = vector.broadcast %19 : f32 to vector<1x200xf32>
    %21 = arith.addf %18, %20 : vector<1x200xf32>
    %cst_17 = arith.constant 0.000000e+00 : f32
    %22 = vector.broadcast %cst_17 : f32 to vector<1x200xf32>
    %23 = arith.subf %22, %21 : vector<1x200xf32>
    %24 = math.exp %23 : vector<1x200xf32>
    %cst_18 = arith.constant 1.000000e+00 : f32
    %25 = vector.broadcast %cst_18 : f32 to vector<1x200xf32>
    %26 = arith.addf %25, %24 : vector<1x200xf32>
    %27 = tpu.reciprocal %26 {approx = true} : vector<1x200xf32> -> vector<1x200xf32>
    %c0_19 = arith.constant 0 : index
    %c0_20 = arith.constant 0 : index
    %28 = vector.load %arg8[%c0_19, %c0_20] : memref<1x200xf32, #tpu.memory_space<vmem>>, vector<1x200xf32>
    tpu.vector_store %arg8[%c0_19, %c0_20], %27 {strides = array<i32>} : memref<1x200xf32, #tpu.memory_space<vmem>>, vector<1x200xf32>,
    return
  }
  func.func @transform_0(%arg0: i32) -> (i32, i32) {
    %c0_i32 = arith.constant 0 : i32
    %c0_i32_0 = arith.constant 0 : i32
    return %arg0, %c0_i32 : i32, i32
  }
  func.func @transform_1(%arg0: i32) -> (i32, i32) {
    %c0_i32 = arith.constant 0 : i32
    %c0_i32_0 = arith.constant 0 : i32
    %c0_i32_1 = arith.constant 0 : i32
    return %c0_i32, %c0_i32_0 : i32, i32
  }
  func.func @transform_2(%arg0: i32) -> (i32, i32) {
    %c0_i32 = arith.constant 0 : i32
    %c0_i32_0 = arith.constant 0 : i32
    %c0_i32_1 = arith.constant 0 : i32
    return %c0_i32, %c0_i32_0 : i32, i32
  }
  func.func @transform_3(%arg0: i32) -> (i32, i32) {
    %c0_i32 = arith.constant 0 : i32
    %c0_i32_0 = arith.constant 0 : i32
    %c0_i32_1 = arith.constant 0 : i32
    return %c0_i32, %c0_i32_0 : i32, i32
  }
  func.func @transform_4(%arg0: i32) -> (i32, i32) {
    %c0_i32 = arith.constant 0 : i32
    %c0_i32_0 = arith.constant 0 : i32
    %c0_i32_1 = arith.constant 0 : i32
    return %c0_i32, %c0_i32_0 : i32, i32
  }
  func.func @transform_5(%arg0: i32) -> (i32, i32) {
    %c0_i32 = arith.constant 0 : i32
    %c0_i32_0 = arith.constant 0 : i32
    %c0_i32_1 = arith.constant 0 : i32
    return %c0_i32, %c0_i32_0 : i32, i32
  }
  func.func @transform_6(%arg0: i32) -> (i32, i32) {
    %c0_i32 = arith.constant 0 : i32
    %c0_i32_0 = arith.constant 0 : i32
    %c0_i32_1 = arith.constant 0 : i32
    return %c0_i32, %c0_i32_0 : i32, i32
  }
  func.func @transform_7(%arg0: i32) -> (i32, i32) {
    %c0_i32 = arith.constant 0 : i32
    %c0_i32_0 = arith.constant 0 : i32
    return %c0_i32, %arg0 : i32, i32
  }
}

</mosaic_0001>

<llo_original>
// kernel: tpu_custom_call.1
$region0: #{tpu_custom_call.1}
  #allocation0 [shape = 'u32[]', space=smem, size = 0x4, offset = 0x4, fixed_abs, tag = 'smem constant byte address 0x4 - core index']
  #allocation1 [shape = 'u32[144,128]{1,0:T(1,128)}', space=vmem, size = 0x12000, scoped, tag = 'internal scratch']
  #allocation2 [shape = 'f32[1,1]{1,0:T(1,128)S(6)}', space=smem, size = 0x200, scoped, tag = 'scoped memory for tpu_custom_call.1']
  %s0 = inlined_call_operand.vmem [shape: bf16[200,64], index: 0, kind: input, shape index: {}]
  %s1 = inlined_call_operand.vmem [shape: bf16[64,128], index: 1, kind: input, shape index: {}]
  %s2 = inlined_call_operand.vmem [shape: f32[1,128], index: 2, kind: input, shape index: {}]
  %s3 = inlined_call_operand.vmem [shape: bf16[128,64], index: 3, kind: input, shape index: {}]
  %s4 = inlined_call_operand.vmem [shape: f32[1,64], index: 4, kind: input, shape index: {}]
  %s5 = inlined_call_operand.vmem [shape: bf16[1,64], index: 5, kind: input, shape index: {}]
  %s6 = inlined_call_operand.<no memory space> [shape: f32[1,1], index: 6, kind: input, shape index: {}]
  %s7 = inlined_call_operand.hbm [shape: f32[1,200], index: 7, kind: output, shape index: {}]
  %s8 = sld [smem:[#allocation0]]
  $region38: #{tpu_custom_call.1} parent=0
    _
  %s10 = ssub.s32 1, %s8
  %s11 = scalar_select 0, %s10, %s8
  %12 = sst [smem:[#allocation2]] %s6
  $region1: #{tpu_custom_call.1} parent=0
    #allocation3 [shape = 'u8[1024]{0}', space=vmem, size = 0x400, scoped, tag = 'output window, operand 0, single buffered']
    #allocation4 [shape = 's32[1]{0}', space=sflag, size = 0x4, scoped, tag = 'scoped memory for tpu_custom_call.1']
    %13 = vsyncpa [#allocation4], 0
    // Predicated region
    $region2: #{tpu_custom_call.1} parent=1 // pred_check
      _
    $region3: #{tpu_custom_call.1} parent=1 // pred_check_branch
      %15 = sbr.rel (0) target = $region5
    $region4: #{tpu_custom_call.1} parent=1 // pred_region
      _
    $region5: #{tpu_custom_call.1} parent=1 // pred_fallthru
      _
    // Predicated region
    $region6: #{tpu_custom_call.1} parent=1 // pred_check
      _
    $region7: #{tpu_custom_call.1} parent=1 // pred_check_branch
      %17 = sbr.rel (0) target = $region9
    $region8: #{tpu_custom_call.1} parent=1 // pred_region
      _
    $region9: #{tpu_custom_call.1} parent=1 // pred_fallthru
      _
    // Predicated region
    $region10: #{tpu_custom_call.1} parent=1 // pred_check
      _
    $region11: #{tpu_custom_call.1} parent=1 // pred_check_branch
      %19 = sbr.rel (0) target = $region13
    $region12: #{tpu_custom_call.1} parent=1 // pred_region
      _
    $region13: #{tpu_custom_call.1} parent=1 // pred_fallthru
      _
    // Predicated region
    $region14: #{tpu_custom_call.1} parent=1 // pred_check
      _
    $region15: #{tpu_custom_call.1} parent=1 // pred_check_branch
      %21 = sbr.rel (0) target = $region17
    $region16: #{tpu_custom_call.1} parent=1 // pred_region
      _
    $region17: #{tpu_custom_call.1} parent=1 // pred_fallthru
      _
    // Predicated region
    $region18: #{tpu_custom_call.1} parent=1 // pred_check
      _
    $region19: #{tpu_custom_call.1} parent=1 // pred_check_branch
      %23 = sbr.rel (0) target = $region21
    $region20: #{tpu_custom_call.1} parent=1 // pred_region
      _
    $region21: #{tpu_custom_call.1} parent=1 // pred_fallthru
      _
    // Predicated region
    $region22: #{tpu_custom_call.1} parent=1 // pred_check
      _
    $region23: #{tpu_custom_call.1} parent=1 // pred_check_branch
      %25 = sbr.rel (0) target = $region25
    $region24: #{tpu_custom_call.1} parent=1 // pred_region
      _
    $region25: #{tpu_custom_call.1} parent=1 // pred_fallthru
      _
    // Predicated region
    $region26: #{tpu_custom_call.1} parent=1 // pred_check
      _
    $region27: #{tpu_custom_call.1} parent=1 // pred_check_branch
      %27 = sbr.rel (0) target = $region29
    $region28: #{tpu_custom_call.1} parent=1 // pred_region
      _
    $region29: #{tpu_custom_call.1} parent=1 // pred_fallthru
      _
    %v29 = vld [vmem:[%s0] sm:$0xf]
    %v30 = vld [vmem:[%s0 + $0x4] sm:$0xf]
    %v31 = vld [vmem:[%s0 + $0x8] sm:$0xf]
    %v32 = vld [vmem:[%s0 + $0xc] sm:$0xf]
    %v33 = vld [vmem:[%s0 + $0x10] sm:$0xf]
    %v34 = vld [vmem:[%s0 + $0x14] sm:$0xf]
    %v35 = vld [vmem:[%s0 + $0x18] sm:$0xf]
    %v36 = vld [vmem:[%s0 + $0x1c] sm:$0xf]
    %v37 = vld [vmem:[%s0 + $0x20] sm:$0xf]
    %v38 = vld [vmem:[%s0 + $0x24] sm:$0xf]
    %v39 = vld [vmem:[%s0 + $0x28] sm:$0xf]
    %v40 = vld [vmem:[%s0 + $0x2c] sm:$0xf]
    %v41 = vld [vmem:[%s0 + $0x30] sm:$0xf]
    %v42 = vld [vmem:[%s0 + $0x34] sm:$0xf]
    %v43 = vld [vmem:[%s0 + $0x38] sm:$0xf]
    %v44 = vld [vmem:[%s0 + $0x3c] sm:$0xf]
    %v45 = vld [vmem:[%s0 + $0x40] sm:$0xf]
    %v46 = vld [vmem:[%s0 + $0x44] sm:$0xf]
    %v47 = vld [vmem:[%s0 + $0x48] sm:$0xf]
    %v48 = vld [vmem:[%s0 + $0x4c] sm:$0xf]
    %v49 = vld [vmem:[%s0 + $0x50] sm:$0xf]
    %v50 = vld [vmem:[%s0 + $0x54] sm:$0xf]
    %v51 = vld [vmem:[%s0 + $0x58] sm:$0xf]
    %v52 = vld [vmem:[%s0 + $0x5c] sm:$0xf]
    %v53 = vld [vmem:[%s0 + $0x60] sm:$0xf]
    %v54 = vld [vmem:[%s1] sm:$0xf]
    %v55 = vld [vmem:[%s1 + $0x4] sm:$0xf]
    %v56 = vld [vmem:[%s1 + $0x8] sm:$0xf]
    %v57 = vld [vmem:[%s1 + $0xc] sm:$0xf]
    %v58 = vld [vmem:[%s1 + $0x10] sm:$0xf]
    %v59 = vld [vmem:[%s1 + $0x14] sm:$0xf]
    %v60 = vld [vmem:[%s1 + $0x18] sm:$0xf]
    %v61 = vld [vmem:[%s1 + $0x1c] sm:$0xf]
    %v62 = vld [vmem:[%s2] sm:$0x1]
    %v64 = vlaneseq
    %v65 = vshrl.u32 %v64, 7
    %v66 = vsub.s32 0, %v65
    %v67 = vrot.slane %v62, %v66
    %v94 = vunpack.c.l.b16 %v29
    %v95 = vunpack.c.l.b16 %v30
    %v96 = vunpack.c.l.b16 %v31
    %v97 = vunpack.c.l.b16 %v32
    %v98 = vunpack.c.l.b16 %v33
    %v99 = vunpack.c.l.b16 %v34
    %v100 = vunpack.c.l.b16 %v35
    %v101 = vunpack.c.l.b16 %v36
    %v102 = vunpack.c.l.b16 %v37
    %v103 = vunpack.c.l.b16 %v38
    %v104 = vunpack.c.l.b16 %v39
    %v105 = vunpack.c.l.b16 %v40
    %v106 = vunpack.c.l.b16 %v41
    %v107 = vunpack.c.l.b16 %v42
    %v108 = vunpack.c.l.b16 %v43
    %v109 = vunpack.c.l.b16 %v44
    %v110 = vunpack.c.l.b16 %v45
    %v111 = vunpack.c.l.b16 %v46
    %v112 = vunpack.c.l.b16 %v47
    %v113 = vunpack.c.l.b16 %v48
    %v114 = vunpack.c.l.b16 %v49
    %v115 = vunpack.c.l.b16 %v50
    %v116 = vunpack.c.l.b16 %v51
    %v117 = vunpack.c.l.b16 %v52
    %v118 = vunpack.c.l.b16 %v53
    %v119 = vpack.c.b16 %v95, %v94
    %v120 = vpack.c.b16 %v97, %v96
    %v121 = vpack.c.b16 %v99, %v98
    %v122 = vpack.c.b16 %v101, %v100
    %v123 = vpack.c.b16 %v103, %v102
    %v124 = vpack.c.b16 %v105, %v104
    %v125 = vpack.c.b16 %v107, %v106
    %v126 = vpack.c.b16 %v109, %v108
    %v127 = vpack.c.b16 %v111, %v110
    %v128 = vpack.c.b16 %v113, %v112
    %v129 = vpack.c.b16 %v115, %v114
    %v130 = vpack.c.b16 %v117, %v116
    %v131 = vpack.c.b16 %v118, %v118
    %v140 = vunpack.c.l.b16 %v54
    %v141 = vunpack.c.l.b16 %v55
    %v142 = vunpack.c.l.b16 %v56
    %v143 = vunpack.c.l.b16 %v57
    %v144 = vunpack.c.l.b16 %v58
    %v145 = vunpack.c.l.b16 %v59
    %v146 = vunpack.c.l.b16 %v60
    %v147 = vunpack.c.l.b16 %v61
    %v148 = vpack.c.b16 %v141, %v140
    %v149 = vpack.c.b16 %v143, %v142
    %v150 = vpack.c.b16 %v145, %v144
    %v151 = vpack.c.b16 %v147, %v146
    %vm156 = vcmask 523264
    %v158 = vsel %vm156, %v119, 0
    %v161 = vsel %vm156, %v120, 0
    %v164 = vsel %vm156, %v121, 0
    %v167 = vsel %vm156, %v122, 0
    %v170 = vsel %vm156, %v123, 0
    %v173 = vsel %vm156, %v124, 0
    %v176 = vsel %vm156, %v125, 0
    %v179 = vsel %vm156, %v126, 0
    %v182 = vsel %vm156, %v127, 0
    %v185 = vsel %vm156, %v128, 0
    %v188 = vsel %vm156, %v129, 0
    %v191 = vsel %vm156, %v130, 0
    %v194 = vsel %vm156, %v131, 0
    %196 = vmatprep.subr.bf16.mxu0 0
    %197 = vmatpush1.bf16.msra.mxu0 0
    %198 = vmatprep.subr.bf16.mxu0 0
    %199 = vmatpush1.bf16.msra.mxu0 0
    %200 = vmatprep.subr.bf16.mxu0 0
    %201 = vmatpush1.bf16.msra.mxu0 0
    %202 = vmatprep.subr.bf16.mxu0 0
    %203 = vmatpush1.bf16.msra.mxu0 0
    %204 = vmatprep.subr.bf16.mxu0 0
    %205 = vmatpush1.bf16.msra.mxu0 %v151
    %206 = vmatprep.subr.bf16.mxu0 0
    %207 = vmatpush1.bf16.msra.mxu0 %v150
    %208 = vmatprep.subr.bf16.mxu0 0
    %209 = vmatpush1.bf16.msra.mxu0 %v149
    %210 = vmatprep.subr.bf16.mxu0 0
    %211 = vmatpush1.bf16.msra.mxu0 %v148
    %212 = vmatprep.subr.bf16.mxu0 0
    %213 = vmatpush2.bf16.msra.mxu0 0
    %214 = vmatprep.subr.bf16.mxu0 0
    %215 = vmatpush2.bf16.msra.mxu0 0
    %216 = vmatprep.subr.bf16.mxu0 0
    %217 = vmatpush2.bf16.msra.mxu0 0
    %218 = vmatprep.subr.bf16.mxu0 0
    %219 = vmatpush2.bf16.msra.mxu0 0
    %220 = vmatprep.subr.bf16.mxu0 0
    %221 = vmatpush2.bf16.msra.mxu0 0
    %222 = vmatprep.subr.bf16.mxu0 0
    %223 = vmatpush2.bf16.msra.mxu0 0
    %224 = vmatprep.subr.bf16.mxu0 0
    %225 = vmatpush2.bf16.msra.mxu0 0
    %226 = vmatprep.subr.bf16.mxu0 0
    %227 = vmatpush2.bf16.msra.mxu0 0
    %228 = vmatprep.mubr.bf16.mxu0 0
    %229 = vmatmul.mubr.bf16.gmra.mxu0 %v158
    %v230 = vpop.f32.mrf.mxu0
    %v231 = vadd.f32 %v67, %v230
    %v232 = vpop.f32.mrf.mxu0
    %v233 = vpop.f32.mrf.mxu0
    %v234 = vadd.f32 %v67, %v233
    %v235 = vpop.f32.mrf.mxu0
    %236 = vmatprep.mubr.bf16.mxu0 0
    %237 = vmatmul.mubr.bf16.gmra.mxu0 %v161
    %v238 = vpop.f32.mrf.mxu0
    %v239 = vadd.f32 %v67, %v238
    %v240 = vpop.f32.mrf.mxu0
    %v241 = vpop.f32.mrf.mxu0
    %v242 = vadd.f32 %v67, %v241
    %v243 = vpop.f32.mrf.mxu0
    %244 = vmatprep.mubr.bf16.mxu0 0
    %245 = vmatmul.mubr.bf16.gmra.mxu0 %v164
    %v246 = vpop.f32.mrf.mxu0
    %v247 = vadd.f32 %v67, %v246
    %v248 = vpop.f32.mrf.mxu0
    %v249 = vpop.f32.mrf.mxu0
    %v250 = vadd.f32 %v67, %v249
    %v251 = vpop.f32.mrf.mxu0
    %252 = vmatprep.mubr.bf16.mxu0 0
    %253 = vmatmul.mubr.bf16.gmra.mxu0 %v167
    %v254 = vpop.f32.mrf.mxu0
    %v255 = vadd.f32 %v67, %v254
    %v256 = vpop.f32.mrf.mxu0
    %v257 = vpop.f32.mrf.mxu0
    %v258 = vadd.f32 %v67, %v257
    %v259 = vpop.f32.mrf.mxu0
    %260 = vmatprep.mubr.bf16.mxu0 0
    %261 = vmatmul.mubr.bf16.gmra.mxu0 %v170
    %v262 = vpop.f32.mrf.mxu0
    %v263 = vadd.f32 %v67, %v262
    %v264 = vpop.f32.mrf.mxu0
    %v265 = vpop.f32.mrf.mxu0
    %v266 = vadd.f32 %v67, %v265
    %v267 = vpop.f32.mrf.mxu0
    %268 = vmatprep.mubr.bf16.mxu0 0
    %269 = vmatmul.mubr.bf16.gmra.mxu0 %v173
    %v270 = vpop.f32.mrf.mxu0
    %v271 = vadd.f32 %v67, %v270
    %v272 = vpop.f32.mrf.mxu0
    %v273 = vpop.f32.mrf.mxu0
    %v274 = vadd.f32 %v67, %v273
    %v275 = vpop.f32.mrf.mxu0
    %276 = vmatprep.mubr.bf16.mxu0 0
    %277 = vmatmul.mubr.bf16.gmra.mxu0 %v176
    %v278 = vpop.f32.mrf.mxu0
    %v279 = vadd.f32 %v67, %v278
    %v280 = vpop.f32.mrf.mxu0
    %v281 = vpop.f32.mrf.mxu0
    %v282 = vadd.f32 %v67, %v281
    %v283 = vpop.f32.mrf.mxu0
    %284 = vmatprep.mubr.bf16.mxu0 0
    %285 = vmatmul.mubr.bf16.gmra.mxu0 %v179
    %v286 = vpop.f32.mrf.mxu0
    %v287 = vadd.f32 %v67, %v286
    %v288 = vpop.f32.mrf.mxu0
    %v289 = vpop.f32.mrf.mxu0
    %v290 = vadd.f32 %v67, %v289
    %v291 = vpop.f32.mrf.mxu0
    %292 = vmatprep.mubr.bf16.mxu0 0
    %293 = vmatmul.mubr.bf16.gmra.mxu0 %v182
    %v294 = vpop.f32.mrf.mxu0
    %v295 = vadd.f32 %v67, %v294
    %v296 = vpop.f32.mrf.mxu0
    %v297 = vpop.f32.mrf.mxu0
    %v298 = vadd.f32 %v67, %v297
    %v299 = vpop.f32.mrf.mxu0
    %300 = vmatprep.mubr.bf16.mxu0 0
    %301 = vmatmul.mubr.bf16.gmra.mxu0 %v185
    %v302 = vpop.f32.mrf.mxu0
    %v303 = vadd.f32 %v67, %v302
    %v304 = vpop.f32.mrf.mxu0
    %v305 = vpop.f32.mrf.mxu0
    %v306 = vadd.f32 %v67, %v305
    %v307 = vpop.f32.mrf.mxu0
    %308 = vmatprep.mubr.bf16.mxu0 0
    %309 = vmatmul.mubr.bf16.gmra.mxu0 %v188
    %v310 = vpop.f32.mrf.mxu0
    %v311 = vadd.f32 %v67, %v310
    %v312 = vpop.f32.mrf.mxu0
    %v313 = vpop.f32.mrf.mxu0
    %v314 = vadd.f32 %v67, %v313
    %v315 = vpop.f32.mrf.mxu0
    %316 = vmatprep.mubr.bf16.mxu0 0
    %317 = vmatmul.mubr.bf16.gmra.mxu0 %v191
    %v318 = vpop.f32.mrf.mxu0
    %v319 = vadd.f32 %v67, %v318
    %v320 = vpop.f32.mrf.mxu0
    %v321 = vpop.f32.mrf.mxu0
    %v322 = vadd.f32 %v67, %v321
    %v323 = vpop.f32.mrf.mxu0
    %324 = vmatprep.mubr.bf16.mxu0 0
    %325 = vmatmul.mubr.bf16.gmra.mxu0 %v194
    %v326 = vpop.f32.mrf.mxu0
    %v327 = vadd.f32 %v67, %v326
    %v328 = vpop.f32.mrf.mxu0
    %v329 = vpop.f32.mrf.mxu0
    %v330 = vpop.f32.mrf.mxu0
    %331 = vdwg.mxu0
    %v332 = vmax.f32 %v231, 0.0
    %v333 = vmax.f32 %v234, 0.0
    %v334 = vmax.f32 %v239, 0.0
    %v335 = vmax.f32 %v242, 0.0
    %v336 = vmax.f32 %v247, 0.0
    %v337 = vmax.f32 %v250, 0.0
    %v338 = vmax.f32 %v255, 0.0
    %v339 = vmax.f32 %v258, 0.0
    %v340 = vmax.f32 %v263, 0.0
    %v341 = vmax.f32 %v266, 0.0
    %v342 = vmax.f32 %v271, 0.0
    %v343 = vmax.f32 %v274, 0.0
    %v344 = vmax.f32 %v279, 0.0
    %v345 = vmax.f32 %v282, 0.0
    %v346 = vmax.f32 %v287, 0.0
    %v347 = vmax.f32 %v290, 0.0
    %v348 = vmax.f32 %v295, 0.0
    %v349 = vmax.f32 %v298, 0.0
    %v350 = vmax.f32 %v303, 0.0
    %v351 = vmax.f32 %v306, 0.0
    %v352 = vmax.f32 %v311, 0.0
    %v353 = vmax.f32 %v314, 0.0
    %v354 = vmax.f32 %v319, 0.0
    %v355 = vmax.f32 %v322, 0.0
    %v356 = vmax.f32 %v327, 0.0
    %v357 = vpack.c.bf16 %v333, %v332
    %v358 = vpack.c.bf16 %v335, %v334
    %v359 = vpack.c.bf16 %v337, %v336
    %v360 = vpack.c.bf16 %v339, %v338
    %v361 = vpack.c.bf16 %v341, %v340
    %v362 = vpack.c.bf16 %v343, %v342
    %v363 = vpack.c.bf16 %v345, %v344
    %v364 = vpack.c.bf16 %v347, %v346
    %v365 = vpack.c.bf16 %v349, %v348
    %v366 = vpack.c.bf16 %v351, %v350
    %v367 = vpack.c.bf16 %v353, %v352
    %v368 = vpack.c.bf16 %v355, %v354
    %v369 = vpack.c.bf16 %v356, %v356
    %v370 = vld [vmem:[%s3] sm:$0xf]
    %v371 = vld [vmem:[%s3 + $0x4] sm:$0xf]
    %v372 = vld [vmem:[%s3 + $0x8] sm:$0xf]
    %v373 = vld [vmem:[%s3 + $0xc] sm:$0xf]
    %v374 = vld [vmem:[%s3 + $0x10] sm:$0xf]
    %v375 = vld [vmem:[%s3 + $0x14] sm:$0xf]
    %v376 = vld [vmem:[%s3 + $0x18] sm:$0xf]
    %v377 = vld [vmem:[%s3 + $0x1c] sm:$0xf]
    %v378 = vld [vmem:[%s3 + $0x20] sm:$0xf]
    %v379 = vld [vmem:[%s3 + $0x24] sm:$0xf]
    %v380 = vld [vmem:[%s3 + $0x28] sm:$0xf]
    %v381 = vld [vmem:[%s3 + $0x2c] sm:$0xf]
    %v382 = vld [vmem:[%s3 + $0x30] sm:$0xf]
    %v383 = vld [vmem:[%s3 + $0x34] sm:$0xf]
    %v384 = vld [vmem:[%s3 + $0x38] sm:$0xf]
    %v385 = vld [vmem:[%s3 + $0x3c] sm:$0xf]
    %v386 = vld [vmem:[%s4] sm:$0x1]
    %v388 = vlaneseq
    %v389 = vshrl.u32 %v388, 7
    %v390 = vsub.s32 0, %v389
    %v391 = vrot.slane %v386, %v390
    %v409 = vunpack.c.l.b16 %v370
    %v410 = vunpack.c.l.b16 %v371
    %v411 = vunpack.c.l.b16 %v372
    %v412 = vunpack.c.l.b16 %v373
    %v413 = vunpack.c.l.b16 %v374
    %v414 = vunpack.c.l.b16 %v375
    %v415 = vunpack.c.l.b16 %v376
    %v416 = vunpack.c.l.b16 %v377
    %v417 = vunpack.c.l.b16 %v378
    %v418 = vunpack.c.l.b16 %v379
    %v419 = vunpack.c.l.b16 %v380
    %v420 = vunpack.c.l.b16 %v381
    %v421 = vunpack.c.l.b16 %v382
    %v422 = vunpack.c.l.b16 %v383
    %v423 = vunpack.c.l.b16 %v384
    %v424 = vunpack.c.l.b16 %v385
    %v425 = vpack.c.b16 %v410, %v409
    %v426 = vpack.c.b16 %v412, %v411
    %v427 = vpack.c.b16 %v414, %v413
    %v428 = vpack.c.b16 %v416, %v415
    %v429 = vpack.c.b16 %v418, %v417
    %v430 = vpack.c.b16 %v420, %v419
    %v431 = vpack.c.b16 %v422, %v421
    %v432 = vpack.c.b16 %v424, %v423
    %441 = vmatprep.subr.bf16.mxu0 0
    %442 = vmatpush1.bf16.msra.mxu0 %v432
    %443 = vmatprep.subr.bf16.mxu0 0
    %444 = vmatpush1.bf16.msra.mxu0 %v431
    %445 = vmatprep.subr.bf16.mxu0 0
    %446 = vmatpush1.bf16.msra.mxu0 %v430
    %447 = vmatprep.subr.bf16.mxu0 0
    %448 = vmatpush1.bf16.msra.mxu0 %v429
    %449 = vmatprep.subr.bf16.mxu0 0
    %450 = vmatpush1.bf16.msra.mxu0 %v428
    %451 = vmatprep.subr.bf16.mxu0 0
    %452 = vmatpush1.bf16.msra.mxu0 %v427
    %453 = vmatprep.subr.bf16.mxu0 0
    %454 = vmatpush1.bf16.msra.mxu0 %v426
    %455 = vmatprep.subr.bf16.mxu0 0
    %456 = vmatpush1.bf16.msra.mxu0 %v425
    %457 = vmatprep.subr.bf16.mxu0 0
    %458 = vmatpush2.bf16.msra.mxu0 0
    %459 = vmatprep.subr.bf16.mxu0 0
    %460 = vmatpush2.bf16.msra.mxu0 0
    %461 = vmatprep.subr.bf16.mxu0 0
    %462 = vmatpush2.bf16.msra.mxu0 0
    %463 = vmatprep.subr.bf16.mxu0 0
    %464 = vmatpush2.bf16.msra.mxu0 0
    %465 = vmatprep.subr.bf16.mxu0 0
    %466 = vmatpush2.bf16.msra.mxu0 0
    %467 = vmatprep.subr.bf16.mxu0 0
    %468 = vmatpush2.bf16.msra.mxu0 0
    %469 = vmatprep.subr.bf16.mxu0 0
    %470 = vmatpush2.bf16.msra.mxu0 0
    %471 = vmatprep.subr.bf16.mxu0 0
    %472 = vmatpush2.bf16.msra.mxu0 0
    %473 = vmatprep.mubr.bf16.mxu0 0
    %474 = vmatmul.mubr.bf16.gmra.mxu0 %v357
    %v475 = vpop.f32.mrf.mxu0
    %v476 = vadd.f32 %v391, %v475
    %v477 = vpop.f32.mrf.mxu0
    %v478 = vpop.f32.mrf.mxu0
    %v479 = vadd.f32 %v391, %v478
    %v480 = vpop.f32.mrf.mxu0
    %481 = vmatprep.mubr.bf16.mxu0 0
    %482 = vmatmul.mubr.bf16.gmra.mxu0 %v358
    %v483 = vpop.f32.mrf.mxu0
    %v484 = vadd.f32 %v391, %v483
    %v485 = vpop.f32.mrf.mxu0
    %v486 = vpop.f32.mrf.mxu0
    %v487 = vadd.f32 %v391, %v486
    %v488 = vpop.f32.mrf.mxu0
    %489 = vmatprep.mubr.bf16.mxu0 0
    %490 = vmatmul.mubr.bf16.gmra.mxu0 %v359
    %v491 = vpop.f32.mrf.mxu0
    %v492 = vadd.f32 %v391, %v491
    %v493 = vpop.f32.mrf.mxu0
    %v494 = vpop.f32.mrf.mxu0
    %v495 = vadd.f32 %v391, %v494
    %v496 = vpop.f32.mrf.mxu0
    %497 = vmatprep.mubr.bf16.mxu0 0
    %498 = vmatmul.mubr.bf16.gmra.mxu0 %v360
    %v499 = vpop.f32.mrf.mxu0
    %v500 = vadd.f32 %v391, %v499
    %v501 = vpop.f32.mrf.mxu0
    %v502 = vpop.f32.mrf.mxu0
    %v503 = vadd.f32 %v391, %v502
    %v504 = vpop.f32.mrf.mxu0
    %505 = vmatprep.mubr.bf16.mxu0 0
    %506 = vmatmul.mubr.bf16.gmra.mxu0 %v361
    %v507 = vpop.f32.mrf.mxu0
    %v508 = vadd.f32 %v391, %v507
    %v509 = vpop.f32.mrf.mxu0
    %v510 = vpop.f32.mrf.mxu0
    %v511 = vadd.f32 %v391, %v510
    %v512 = vpop.f32.mrf.mxu0
    %513 = vmatprep.mubr.bf16.mxu0 0
    %514 = vmatmul.mubr.bf16.gmra.mxu0 %v362
    %v515 = vpop.f32.mrf.mxu0
    %v516 = vadd.f32 %v391, %v515
    %v517 = vpop.f32.mrf.mxu0
    %v518 = vpop.f32.mrf.mxu0
    %v519 = vadd.f32 %v391, %v518
    %v520 = vpop.f32.mrf.mxu0
    %521 = vmatprep.mubr.bf16.mxu0 0
    %522 = vmatmul.mubr.bf16.gmra.mxu0 %v363
    %v523 = vpop.f32.mrf.mxu0
    %v524 = vadd.f32 %v391, %v523
    %v525 = vpop.f32.mrf.mxu0
    %v526 = vpop.f32.mrf.mxu0
    %v527 = vadd.f32 %v391, %v526
    %v528 = vpop.f32.mrf.mxu0
    %529 = vmatprep.mubr.bf16.mxu0 0
    %530 = vmatmul.mubr.bf16.gmra.mxu0 %v364
    %v531 = vpop.f32.mrf.mxu0
    %v532 = vadd.f32 %v391, %v531
    %v533 = vpop.f32.mrf.mxu0
    %v534 = vpop.f32.mrf.mxu0
    %v535 = vadd.f32 %v391, %v534
    %v536 = vpop.f32.mrf.mxu0
    %537 = vmatprep.mubr.bf16.mxu0 0
    %538 = vmatmul.mubr.bf16.gmra.mxu0 %v365
    %v539 = vpop.f32.mrf.mxu0
    %v540 = vadd.f32 %v391, %v539
    %v541 = vpop.f32.mrf.mxu0
    %v542 = vpop.f32.mrf.mxu0
    %v543 = vadd.f32 %v391, %v542
    %v544 = vpop.f32.mrf.mxu0
    %545 = vmatprep.mubr.bf16.mxu0 0
    %546 = vmatmul.mubr.bf16.gmra.mxu0 %v366
    %v547 = vpop.f32.mrf.mxu0
    %v548 = vadd.f32 %v391, %v547
    %v549 = vpop.f32.mrf.mxu0
    %v550 = vpop.f32.mrf.mxu0
    %v551 = vadd.f32 %v391, %v550
    %v552 = vpop.f32.mrf.mxu0
    %553 = vmatprep.mubr.bf16.mxu0 0
    %554 = vmatmul.mubr.bf16.gmra.mxu0 %v367
    %v555 = vpop.f32.mrf.mxu0
    %v556 = vadd.f32 %v391, %v555
    %v557 = vpop.f32.mrf.mxu0
    %v558 = vpop.f32.mrf.mxu0
    %v559 = vadd.f32 %v391, %v558
    %v560 = vpop.f32.mrf.mxu0
    %561 = vmatprep.mubr.bf16.mxu0 0
    %562 = vmatmul.mubr.bf16.gmra.mxu0 %v368
    %v563 = vpop.f32.mrf.mxu0
    %v564 = vadd.f32 %v391, %v563
    %v565 = vpop.f32.mrf.mxu0
    %v566 = vpop.f32.mrf.mxu0
    %v567 = vadd.f32 %v391, %v566
    %v568 = vpop.f32.mrf.mxu0
    %569 = vmatprep.mubr.bf16.mxu0 0
    %570 = vmatmul.mubr.bf16.gmra.mxu0 %v369
    %v571 = vpop.f32.mrf.mxu0
    %v572 = vadd.f32 %v391, %v571
    %v573 = vpop.f32.mrf.mxu0
    %v574 = vpop.f32.mrf.mxu0
    %v575 = vpop.f32.mrf.mxu0
    %576 = vdwg.mxu0
    %v577 = vmax.f32 %v476, 0.0
    %v578 = vmax.f32 %v479, 0.0
    %v579 = vmax.f32 %v484, 0.0
    %v580 = vmax.f32 %v487, 0.0
    %v581 = vmax.f32 %v492, 0.0
    %v582 = vmax.f32 %v495, 0.0
    %v583 = vmax.f32 %v500, 0.0
    %v584 = vmax.f32 %v503, 0.0
    %v585 = vmax.f32 %v508, 0.0
    %v586 = vmax.f32 %v511, 0.0
    %v587 = vmax.f32 %v516, 0.0
    %v588 = vmax.f32 %v519, 0.0
    %v589 = vmax.f32 %v524, 0.0
    %v590 = vmax.f32 %v527, 0.0
    %v591 = vmax.f32 %v532, 0.0
    %v592 = vmax.f32 %v535, 0.0
    %v593 = vmax.f32 %v540, 0.0
    %v594 = vmax.f32 %v543, 0.0
    %v595 = vmax.f32 %v548, 0.0
    %v596 = vmax.f32 %v551, 0.0
    %v597 = vmax.f32 %v556, 0.0
    %v598 = vmax.f32 %v559, 0.0
    %v599 = vmax.f32 %v564, 0.0
    %v600 = vmax.f32 %v567, 0.0
    %v601 = vmax.f32 %v572, 0.0
    %v602 = vld [vmem:[%s5] sm:$0x1]
    %v603 = vpack.c.bf16 %v578, %v577
    %v604 = vpack.c.bf16 %v580, %v579
    %v605 = vpack.c.bf16 %v582, %v581
    %v606 = vpack.c.bf16 %v584, %v583
    %v607 = vpack.c.bf16 %v586, %v585
    %v608 = vpack.c.bf16 %v588, %v587
    %v609 = vpack.c.bf16 %v590, %v589
    %v610 = vpack.c.bf16 %v592, %v591
    %v611 = vpack.c.bf16 %v594, %v593
    %v612 = vpack.c.bf16 %v596, %v595
    %v613 = vpack.c.bf16 %v598, %v597
    %v614 = vpack.c.bf16 %v600, %v599
    %v615 = vpack.c.bf16 %v601, %v601
    %s616 = sld [smem:[#allocation2]]
    %v617 = vstv %s616
    %v619 = vsel %vm156, %v602, 0
    %v622 = vsel %vm156, %v603, 0
    %v625 = vsel %vm156, %v604, 0
    %v628 = vsel %vm156, %v605, 0
    %v631 = vsel %vm156, %v606, 0
    %v634 = vsel %vm156, %v607, 0
    %v637 = vsel %vm156, %v608, 0
    %v640 = vsel %vm156, %v609, 0
    %v643 = vsel %vm156, %v610, 0
    %v646 = vsel %vm156, %v611, 0
    %v649 = vsel %vm156, %v612, 0
    %v652 = vsel %vm156, %v613, 0
    %v655 = vsel %vm156, %v614, 0
    %v658 = vsel %vm156, %v615, 0
    %660 = vmatprep.subr.bf16.mxu0 0
    %661 = vmatpush1.bf16.xpose.msra.mxu0 %v643
    %662 = vmatprep.subr.bf16.mxu0 0
    %663 = vmatpush1.bf16.xpose.msra.mxu0 %v640
    %664 = vmatprep.subr.bf16.mxu0 0
    %665 = vmatpush1.bf16.xpose.msra.mxu0 %v637
    %666 = vmatprep.subr.bf16.mxu0 0
    %667 = vmatpush1.bf16.xpose.msra.mxu0 %v634
    %668 = vmatprep.subr.bf16.mxu0 0
    %669 = vmatpush1.bf16.xpose.msra.mxu0 %v631
    %670 = vmatprep.subr.bf16.mxu0 0
    %671 = vmatpush1.bf16.xpose.msra.mxu0 %v628
    %672 = vmatprep.subr.bf16.mxu0 0
    %673 = vmatpush1.bf16.xpose.msra.mxu0 %v625
    %674 = vmatprep.subr.bf16.mxu0 0
    %675 = vmatpush1.bf16.xpose.msra.mxu0 %v622
    %676 = vmatprep.subr.bf16.mxu0 0
    %677 = vmatpush2.bf16.xpose.msra.mxu0 0
    %678 = vmatprep.subr.bf16.mxu0 0
    %679 = vmatpush2.bf16.xpose.msra.mxu0 0
    %680 = vmatprep.subr.bf16.mxu0 0
    %681 = vmatpush2.bf16.xpose.msra.mxu0 0
    %682 = vmatprep.subr.bf16.mxu0 0
    %683 = vmatpush2.bf16.xpose.msra.mxu0 %v658
    %684 = vmatprep.subr.bf16.mxu0 0
    %685 = vmatpush2.bf16.xpose.msra.mxu0 %v655
    %686 = vmatprep.subr.bf16.mxu0 0
    %687 = vmatpush2.bf16.xpose.msra.mxu0 %v652
    %688 = vmatprep.subr.bf16.mxu0 0
    %689 = vmatpush2.bf16.xpose.msra.mxu0 %v649
    %690 = vmatprep.subr.bf16.mxu0 0
    %691 = vmatpush2.bf16.xpose.msra.mxu0 %v646
    %692 = vmatprep.mubr.bf16.mxu0 0
    %693 = vmatmul.mubr.bf16.gmra.mxu0 %v619
    %v694 = vpop.f32.mrf.mxu0
    %v695 = vadd.f32 %v617, %v694
    %v696 = vpop.f32.mrf.mxu0
    %v697 = vadd.f32 %v617, %v696
    %v698 = vpop.f32.mrf.mxu0
    %v699 = vpop.f32.mrf.mxu0
    %700 = vdwg.mxu0
    %v701 = vsub.f32 0.0, %v695
    %v702 = vsub.f32 0.0, %v697
    %v703 = vmul.f32 %v701, 1.442695
    %v704 = vpow.pop %v703
    %v705 = vmul.f32 %v702, 1.442695
    %v706 = vpow.pop %v705
    %v707 = vadd.f32 %v704, 1.0
    %v708 = vadd.f32 %v706, 1.0
    %v709 = vrcp.pop %v707
    %v710 = vrcp.pop %v708
    %v713 = vcombine.low %v709, %v710
    %v715 = vunpack.c.l.s4 1966171168
    %v716 = vunpack.c.0.s8 %v715
    %v717 = vlaneseq
    %v718 = vshrl.u32 %v717, 7
    %v719 = vsub.s32 %v716, %v718
    %v720 = vrot.slane %v713, %v719
    %v722 = vunpack.c.l.s4 1966171168
    %v723 = vunpack.c.0.s8 %v722
    %v724 = vlaneseq
    %v725 = vshrl.u32 %v724, 7
    %v726 = vsub.s32 %v723, %v725
    %v727 = vrot.slane %v720, %v726
    %v729 = vlaneseq
    %vm730 = vcmp.ge.s32.totalorder %v729, 0
    %vm731 = vcmp.lt.s32.totalorder %v729, 200
    %vm732 = vmand %vm730, %vm731
    %733 = vst.msk [vmem:[#allocation3] sm:$0x3] %vm732, %v727
    // Predicated region
    $region30: #{tpu_custom_call.1} parent=1 // pred_check
      _
    $region31: #{tpu_custom_call.1} parent=1 // pred_check_branch
      %735 = sbr.rel (0) target = $region33
    $region32: #{tpu_custom_call.1} parent=1 // pred_region
      %s737 = ssub.s32 32, 32
      %738 = vsyncadd [#allocation4], %s737
      %s740 = sshll.u32 [#allocation3], 4
      %s741 = int_to_ptr.vmem [resolvable:$true] %s740
      %743 = dma.vmem_to_hbm [thread:$0]  %s741, 32, %s7, [#allocation4]
    $region33: #{tpu_custom_call.1} parent=1 // pred_fallthru
      _
    // Predicated region
    $region34: #{tpu_custom_call.1} parent=1 // pred_check
      _
    $region35: #{tpu_custom_call.1} parent=1 // pred_check_branch
      %745 = sbr.rel (0) target = $region37
    $region36: #{tpu_custom_call.1} parent=1 // pred_region
      %746 = dma.done [#allocation4], 32
    $region37: #{tpu_custom_call.1} parent=1 // pred_fallthru
      _
    %747 = vsyncpa [#allocation4], 1

</llo_original>
